<compile_context>
chip_gen: v5e
topology: v5e:2x2
jax: 0.10.0
libtpu: 0.0.40
codegen_flags: <defaults>
</compile_context>

<pallas_src>
import jax
import jax.numpy as jnp
from jax.experimental import pallas as pl
from jax.experimental.pallas import tpu as pltpu


def _nfl_kernel(xa_ref,           # (T*Bp, 2I) combined fwd/rev time-major input
                wih_ref,          # (2I, 8H)   block-structured input->gate weights
                whh_ref,          # (2H, 8H)   block-diagonal hidden->gate weights
                b_ref,            # (1, 8H)    fused biases (g-columns pre-scaled)
                h0_ref, c0_ref,   # (Bp, 2H)   [fwd | rev] initial states
                w1_ref,           # (T*2H, 32) step-permuted Linear1 weight
                b1_ref, w2_ref, b2_ref, w3_ref, b3_ref,
                out_ref,          # (Bp, O)
                flat_ref):        # (Bp, T*2H) scratch: relu(L) in step order
    Bp = h0_ref.shape[0]
    H2 = h0_ref.shape[1]          # 2H
    H = H2 // 2
    T = flat_ref.shape[1] // H2

    # ---- hoisted combined input projection (both directions, all steps) ----
    # Row s*Bp+b already pairs fwd time s with rev time T-1-s, so no per-step
    # select / time-reverse is needed inside the recurrence.
    xproj = (jnp.dot(xa_ref[...], wih_ref[...],
                     preferred_element_type=jnp.float32)
             + b_ref[...])                                    # (T*Bp, 8H)

    whh = whh_ref[...]                                        # (2H, 8H)
    h = h0_ref[...]                                           # (Bp, 2H)
    c = c0_ref[...]                                           # (Bp, 2H)

    # Fused time loop: step s advances the forward LSTM at time s and the
    # reverse LSTM at time T-1-s (independent recurrences).
    for s in range(T):
        xg = xproj[s * Bp:(s + 1) * Bp, :]                    # sublane-aligned slab
        gates = xg + jnp.dot(h, whh, preferred_element_type=jnp.float32)  # (Bp, 8H)

        # Single full-width sigmoid; g-gate columns were pre-scaled by 2 so
        # tanh(x) = 2*sigmoid(2x) - 1 comes out of the same pass.
        sig = jax.nn.sigmoid(gates)
        i_g = sig[:, 0:2 * H]
        f_g = sig[:, 2 * H:4 * H]
        o_g = sig[:, 4 * H:6 * H]
        g_g = 2.0 * sig[:, 6 * H:] - 1.0

        c = f_g * c + i_g * g_g
        h = o_g * jnp.tanh(c)

        # Lane-dense flatten in fused-step order (filler, off critical path).
        flat_ref[:, s * H2:(s + 1) * H2] = jnp.maximum(h, 0.0)

    # ---- MLP head epilogue -------------------------------------------------
    z1 = jnp.dot(flat_ref[...], w1_ref[...],
                 preferred_element_type=jnp.float32) + b1_ref[...]
    z1 = jnp.maximum(z1, 0.0)
    z2 = jnp.dot(z1, w2_ref[...], preferred_element_type=jnp.float32) + b2_ref[...]
    z2 = jnp.maximum(z2, 0.0)
    z3 = jnp.dot(z2, w3_ref[...], preferred_element_type=jnp.float32) + b3_ref[...]

    # Exact softmax(dim=1) — epilogue-only cost, matches torch numerics.
    z3 = z3 - jnp.max(z3, axis=1, keepdims=True)
    e = jnp.exp(z3)
    out_ref[...] = e / jnp.sum(e, axis=1, keepdims=True)


def nfl_lstm_classifier(x, fused):
    """x: (B, T, input_size) float32. Returns (B, output_size) softmax probs."""
    B, T, I = x.shape
    O = fused["w3"].shape[1]
    H2 = fused["whh"].shape[0]                       # 2H
    Bp = max(8, -(-B // 8) * 8)                      # pad batch to sublane width

    # Wrapper-side (XLA) data prep — all free relative to the kernel:
    #   time-major, batch-pad to Bp, pair fwd time s with rev time T-1-s.
    x_tm = jnp.transpose(x, (1, 0, 2))               # (T, B, I)
    x_tm = jnp.pad(x_tm, ((0, 0), (0, Bp - B), (0, 0)))
    x_aug = jnp.concatenate([x_tm, x_tm[::-1]], axis=-1).reshape(T * Bp, 2 * I)
    h0 = jnp.pad(fused["h0"], ((0, Bp - B), (0, 0)))
    c0 = jnp.pad(fused["c0"], ((0, Bp - B), (0, 0)))

    args = (x_aug, fused["wih"], fused["whh"], fused["b"], h0, c0,
            fused["w1p"], fused["b1"], fused["w2"], fused["b2"],
            fused["w3"], fused["b3"])
    vmem = pl.BlockSpec(memory_space=pltpu.MemorySpace.VMEM)
    out = pl.pallas_call(
        _nfl_kernel,
        out_shape=jax.ShapeDtypeStruct((Bp, O), jnp.float32),
        in_specs=[vmem] * len(args),
        out_specs=vmem,
        scratch_shapes=[pltpu.VMEM((Bp, T * H2), jnp.float32)],
    )(*args)
    return out[:B]


# --------------------------------------------------------------------------
# Parameter construction (torch-equivalent layout) and fusion for the kernel.
# --------------------------------------------------------------------------
def init_params(key, *, input_size, hidden_size, seq_len, output_size, batch_size):
    """Per-direction LSTM weights stored transposed (in, 4H), torch gate order
    i,f,g,o; biases b_ih+b_hh folded; MLP Linear weights stored as (in, out)."""
    H = hidden_size
    ks = jax.random.split(key, 16)
    s_lstm = 1.0 / jnp.sqrt(jnp.float32(H))

    def u(k, shape, scale):
        return jax.random.uniform(k, shape, jnp.float32, -scale, scale)

    flat_dim = 2 * H * seq_len
    return {
        "wih_f": u(ks[0], (input_size, 4 * H), s_lstm),
        "whh_f": u(ks[1], (H, 4 * H), s_lstm),
        "b_f":   u(ks[2], (1, 4 * H), s_lstm),
        "wih_r": u(ks[3], (input_size, 4 * H), s_lstm),
        "whh_r": u(ks[4], (H, 4 * H), s_lstm),
        "b_r":   u(ks[5], (1, 4 * H), s_lstm),
        # TODO(synk): torch draws h0/c0 with randn at every forward; here they
        # are deterministic PRNG draws passed in as parameters.
        "h0": jax.random.normal(ks[6], (2, batch_size, H), jnp.float32),
        "c0": jax.random.normal(ks[7], (2, batch_size, H), jnp.float32),
        "w1": u(ks[8], (flat_dim, 32), 1.0 / jnp.sqrt(jnp.float32(flat_dim))),
        "b1": u(ks[9], (1, 32), 1.0 / jnp.sqrt(jnp.float32(flat_dim))),
        "w2": u(ks[10], (32, 16), 1.0 / jnp.sqrt(jnp.float32(32))),
        "b2": u(ks[11], (1, 16), 1.0 / jnp.sqrt(jnp.float32(32))),
        "w3": u(ks[12], (16, output_size), 1.0 / jnp.sqrt(jnp.float32(16))),
        "b3": u(ks[13], (1, output_size), 1.0 / jnp.sqrt(jnp.float32(16))),
    }


def prepare_fused_params(p):
    """Rearrange per-direction torch-order weights into the fused kernel layout.

    Fused gate column layout (8H wide): [i_f,i_r, f_f,f_r, o_f,o_r, g_f,g_r],
    with the g columns pre-scaled by 2 so the kernel can use a single sigmoid
    (tanh(x) = 2*sigmoid(2x) - 1). Pure host-side reshuffle / exact rescale.
    """
    H = p["whh_f"].shape[0]
    I = p["wih_f"].shape[0]
    T = p["w1"].shape[0] // (2 * H)

    def fuse_cols(mf, mr):
        def blk(m, g):  # torch gate order: 0=i, 1=f, 2=g, 3=o
            return m[..., g * H:(g + 1) * H]
        return jnp.concatenate([blk(mf, 0), blk(mr, 0),
                                blk(mf, 1), blk(mr, 1),
                                blk(mf, 3), blk(mr, 3),
                                blk(mf, 2), blk(mr, 2)], axis=-1)

    def scale_g(m):  # last 2H fused columns are the g gate -> pre-scale by 2
        return jnp.concatenate([m[..., :6 * H], 2.0 * m[..., 6 * H:]], axis=-1)

    # Input weights, block-structured over the augmented [x_fwd | x_rev] input:
    # rows 0:I feed only forward-direction gate columns, rows I:2I only reverse.
    zeros_i = jnp.zeros((I, 4 * H), jnp.float32)
    wih_f_pad = jnp.concatenate([p["wih_f"], zeros_i], axis=0)      # (2I, 4H)
    wih_r_pad = jnp.concatenate([zeros_i, p["wih_r"]], axis=0)      # (2I, 4H)
    wih_aug = scale_g(fuse_cols(wih_f_pad, wih_r_pad))              # (2I, 8H)

    # Hidden weights, block-diagonal over h = [h_f | h_r].
    zeros_h = jnp.zeros((H, 4 * H), jnp.float32)
    whh_f_pad = jnp.concatenate([p["whh_f"], zeros_h], axis=0)      # (2H, 4H)
    whh_r_pad = jnp.concatenate([zeros_h, p["whh_r"]], axis=0)      # (2H, 4H)
    whh_both = scale_g(fuse_cols(whh_f_pad, whh_r_pad))             # (2H, 8H)

    b_both = scale_g(fuse_cols(p["b_f"], p["b_r"]))                 # (1, 8H)

    h0_both = jnp.concatenate([p["h0"][0], p["h0"][1]], axis=1)     # (B, 2H)
    c0_both = jnp.concatenate([p["c0"][0], p["c0"][1]], axis=1)     # (B, 2H)

    # Step-permuted Linear1 weight: kernel step s writes [h_f(t=s), h_r(t=T-1-s)]
    # into flat lane block s; torch.flatten layout is
    #   flat[:, t*2H : t*2H+H]      <- fwd h at t
    #   flat[:, t*2H+H : (t+1)*2H]  <- rev h at t
    w1 = p["w1"]                                                    # (T*2H, 32)
    w1_perm = jnp.concatenate(
        [jnp.concatenate(
            [w1[s * 2 * H: s * 2 * H + H, :],
             w1[(T - 1 - s) * 2 * H + H: (T - 1 - s) * 2 * H + 2 * H, :]],
            axis=0)
         for s in range(T)], axis=0)                                # (T*2H, 32)

    return dict(wih=wih_aug, whh=whh_both, b=b_both,
                h0=h0_both, c0=c0_both, w1p=w1_perm,
                b1=p["b1"], w2=p["w2"], b2=p["b2"],
                w3=p["w3"], b3=p["b3"])


def _reference_forward(x, p):
    """Pure-JAX unfused reference (straight transcription of the torch module)."""
    B, T, I = x.shape
    H = p["whh_f"].shape[0]

    def cell(xt, h, c, wih, whh, b):
        gates = xt @ wih + h @ whh + b
        i = jax.nn.sigmoid(gates[:, 0 * H:1 * H])
        f = jax.nn.sigmoid(gates[:, 1 * H:2 * H])
        g = jnp.tanh(gates[:, 2 * H:3 * H])
        o = jax.nn.sigmoid(gates[:, 3 * H:4 * H])
        c = f * c + i * g
        return o * jnp.tanh(c), c

    hf, cf = p["h0"][0], p["c0"][0]
    hr, cr = p["h0"][1], p["c0"][1]
    outs_f = [None] * T
    outs_r = [None] * T
    for t in range(T):
        hf, cf = cell(x[:, t, :], hf, cf, p["wih_f"], p["whh_f"], p["b_f"])
        outs_f[t] = hf
    for t in range(T - 1, -1, -1):
        hr, cr = cell(x[:, t, :], hr, cr, p["wih_r"], p["whh_r"], p["b_r"])
        outs_r[t] = hr
    pieces = []
    for t in range(T):
        pieces.append(outs_f[t])
        pieces.append(outs_r[t])
    flat = jnp.concatenate(pieces, axis=1)
    z = jnp.maximum(flat, 0.0) @ p["w1"] + p["b1"]
    z = jnp.maximum(z, 0.0) @ p["w2"] + p["b2"]
    z = jnp.maximum(z, 0.0) @ p["w3"] + p["b3"]
    return jax.nn.softmax(z, axis=1)


if __name__ == "__main__":
    # Module hyperparameters (num_layers=1, bidirectional=True).
    batch_size = 2
    seq_len = 8          # intput_data_length
    input_size = 8       # intput_size
    hidden_size = 16
    output_size = 4

    key = jax.random.PRNGKey(0)
    k_x, k_p = jax.random.split(key)
    x = jax.random.normal(k_x, (batch_size, seq_len, input_size), jnp.float32)
    params = init_params(k_p,
                         input_size=input_size, hidden_size=hidden_size,
                         seq_len=seq_len, output_size=output_size,
                         batch_size=batch_size)
    fused = prepare_fused_params(params)

    out = nfl_lstm_classifier(x, fused)
    out = jax.block_until_ready(out)

    assert out.shape == (batch_size, output_size)
    # exact softmax -> rows sum to 1 up to f32 rounding
    assert jnp.allclose(jnp.sum(out, axis=1), 1.0, atol=1e-4)
    # fused kernel must match the unfused pure-JAX reference
    ref = _reference_forward(x, params)
    assert jnp.allclose(out, ref, atol=5e-3)
    print("KERNEL_OK")
</pallas_src>

<mosaic_0001>
module attributes {stable_mosaic.version = 11 : i64} {
  func.func @_nfl_kernel(%arg0: memref<64x16xf32, #tpu.memory_space<vmem>>, %arg1: memref<16x128xf32, #tpu.memory_space<vmem>>, %arg2: memref<32x128xf32, #tpu.memory_space<vmem>>, %arg3: memref<1x128xf32, #tpu.memory_space<vmem>>, %arg4: memref<8x32xf32, #tpu.memory_space<vmem>>, %arg5: memref<8x32xf32, #tpu.memory_space<vmem>>, %arg6: memref<256x32xf32, #tpu.memory_space<vmem>>, %arg7: memref<1x32xf32, #tpu.memory_space<vmem>>, %arg8: memref<32x16xf32, #tpu.memory_space<vmem>>, %arg9: memref<1x16xf32, #tpu.memory_space<vmem>>, %arg10: memref<16x4xf32, #tpu.memory_space<vmem>>, %arg11: memref<1x4xf32, #tpu.memory_space<vmem>>, %arg12: memref<8x4xf32, #tpu.memory_space<vmem>>, %arg13: memref<8x256xf32, #tpu.memory_space<vmem>>) attributes {dimension_semantics = [], scalar_prefetch = 0 : i64, scratch_operands = 1 : i64, tpu.core_type = #tpu.core_type<tc>} {
    %c0 = arith.constant 0 : index
    %c0_0 = arith.constant 0 : index
    %0 = vector.load %arg0[%c0, %c0_0] : memref<64x16xf32, #tpu.memory_space<vmem>>, vector<64x16xf32>
    %c0_1 = arith.constant 0 : index
    %c0_2 = arith.constant 0 : index
    %1 = vector.load %arg1[%c0_1, %c0_2] : memref<16x128xf32, #tpu.memory_space<vmem>>, vector<16x128xf32>
    %cst = arith.constant dense<0.000000e+00> : vector<64x128xf32>
    %2 = tpu.matmul %0, %1, %cst {dimension_numbers = #tpu.dot_dimension_numbers<[1], [0], [0], [1], [0, 0, 1, 1], [], []>} : vector<64x16xf32>, vector<16x128xf32>, vector<64x128xf32> -> vector<64x128xf32>
    %c0_3 = arith.constant 0 : index
    %c0_4 = arith.constant 0 : index
    %3 = vector.load %arg3[%c0_3, %c0_4] : memref<1x128xf32, #tpu.memory_space<vmem>>, vector<1x128xf32>
    %4 = vector.broadcast %3 : vector<1x128xf32> to vector<64x128xf32>
    %5 = arith.addf %2, %4 : vector<64x128xf32>
    %c0_5 = arith.constant 0 : index
    %c0_6 = arith.constant 0 : index
    %6 = vector.load %arg2[%c0_5, %c0_6] : memref<32x128xf32, #tpu.memory_space<vmem>>, vector<32x128xf32>
    %c0_7 = arith.constant 0 : index
    %c0_8 = arith.constant 0 : index
    %7 = vector.load %arg4[%c0_7, %c0_8] : memref<8x32xf32, #tpu.memory_space<vmem>>, vector<8x32xf32>
    %c0_9 = arith.constant 0 : index
    %c0_10 = arith.constant 0 : index
    %8 = vector.load %arg5[%c0_9, %c0_10] : memref<8x32xf32, #tpu.memory_space<vmem>>, vector<8x32xf32>
    %9 = vector.extract_strided_slice %5 {offsets = [0, 0], sizes = [8, 128], strides = [1, 1]} : vector<64x128xf32> to vector<8x128xf32>
    %cst_11 = arith.constant dense<0.000000e+00> : vector<8x128xf32>
    %10 = tpu.matmul %7, %6, %cst_11 {dimension_numbers = #tpu.dot_dimension_numbers<[1], [0], [0], [1], [0, 0, 1, 1], [], []>} : vector<8x32xf32>, vector<32x128xf32>, vector<8x128xf32> -> vector<8x128xf32>
    %11 = arith.addf %9, %10 : vector<8x128xf32>
    %12 = arith.negf %11 : vector<8x128xf32>
    %13 = math.exp %12 : vector<8x128xf32>
    %cst_12 = arith.constant 1.000000e+00 : f32
    %14 = vector.broadcast %cst_12 : f32 to vector<8x128xf32>
    %15 = arith.addf %14, %13 : vector<8x128xf32>
    %16 = arith.divf %14, %15 : vector<8x128xf32>
    %17 = vector.extract_strided_slice %16 {offsets = [0, 0], sizes = [8, 32], strides = [1, 1]} : vector<8x128xf32> to vector<8x32xf32>
    %18 = vector.extract_strided_slice %16 {offsets = [0, 32], sizes = [8, 32], strides = [1, 1]} : vector<8x128xf32> to vector<8x32xf32>
    %19 = vector.extract_strided_slice %16 {offsets = [0, 64], sizes = [8, 32], strides = [1, 1]} : vector<8x128xf32> to vector<8x32xf32>
    %20 = vector.extract_strided_slice %16 {offsets = [0, 96], sizes = [8, 32], strides = [1, 1]} : vector<8x128xf32> to vector<8x32xf32>
    %cst_13 = arith.constant 2.000000e+00 : f32
    %21 = vector.broadcast %cst_13 : f32 to vector<8x32xf32>
    %22 = arith.mulf %21, %20 : vector<8x32xf32>
    %cst_14 = arith.constant 1.000000e+00 : f32
    %23 = vector.broadcast %cst_14 : f32 to vector<8x32xf32>
    %24 = arith.subf %22, %23 : vector<8x32xf32>
    %25 = arith.mulf %18, %8 : vector<8x32xf32>
    %26 = arith.mulf %17, %24 : vector<8x32xf32>
    %27 = arith.addf %25, %26 : vector<8x32xf32>
    %28 = math.tanh %27 : vector<8x32xf32>
    %29 = arith.mulf %19, %28 : vector<8x32xf32>
    %cst_15 = arith.constant 0.000000e+00 : f32
    %30 = vector.broadcast %cst_15 : f32 to vector<8x32xf32>
    %31 = arith.maximumf %29, %30 : vector<8x32xf32>
    %c0_16 = arith.constant 0 : index
    %c0_17 = arith.constant 0 : index
    %32 = vector.load %arg13[%c0_16, %c0_17] : memref<8x256xf32, #tpu.memory_space<vmem>>, vector<8x32xf32>
    tpu.vector_store %arg13[%c0_16, %c0_17], %31 {strides = array<i32>} : memref<8x256xf32, #tpu.memory_space<vmem>>, vector<8x32xf32>,
    %33 = vector.extract_strided_slice %5 {offsets = [8, 0], sizes = [8, 128], strides = [1, 1]} : vector<64x128xf32> to vector<8x128xf32>
    %cst_18 = arith.constant dense<0.000000e+00> : vector<8x128xf32>
    %34 = tpu.matmul %29, %6, %cst_18 {dimension_numbers = #tpu.dot_dimension_numbers<[1], [0], [0], [1], [0, 0, 1, 1], [], []>} : vector<8x32xf32>, vector<32x128xf32>, vector<8x128xf32> -> vector<8x128xf32>
    %35 = arith.addf %33, %34 : vector<8x128xf32>
    %36 = arith.negf %35 : vector<8x128xf32>
    %37 = math.exp %36 : vector<8x128xf32>
    %cst_19 = arith.constant 1.000000e+00 : f32
    %38 = vector.broadcast %cst_19 : f32 to vector<8x128xf32>
    %39 = arith.addf %38, %37 : vector<8x128xf32>
    %40 = arith.divf %38, %39 : vector<8x128xf32>
    %41 = vector.extract_strided_slice %40 {offsets = [0, 0], sizes = [8, 32], strides = [1, 1]} : vector<8x128xf32> to vector<8x32xf32>
    %42 = vector.extract_strided_slice %40 {offsets = [0, 32], sizes = [8, 32], strides = [1, 1]} : vector<8x128xf32> to vector<8x32xf32>
    %43 = vector.extract_strided_slice %40 {offsets = [0, 64], sizes = [8, 32], strides = [1, 1]} : vector<8x128xf32> to vector<8x32xf32>
    %44 = vector.extract_strided_slice %40 {offsets = [0, 96], sizes = [8, 32], strides = [1, 1]} : vector<8x128xf32> to vector<8x32xf32>
    %cst_20 = arith.constant 2.000000e+00 : f32
    %45 = vector.broadcast %cst_20 : f32 to vector<8x32xf32>
    %46 = arith.mulf %45, %44 : vector<8x32xf32>
    %cst_21 = arith.constant 1.000000e+00 : f32
    %47 = vector.broadcast %cst_21 : f32 to vector<8x32xf32>
    %48 = arith.subf %46, %47 : vector<8x32xf32>
    %49 = arith.mulf %42, %27 : vector<8x32xf32>
    %50 = arith.mulf %41, %48 : vector<8x32xf32>
    %51 = arith.addf %49, %50 : vector<8x32xf32>
    %52 = math.tanh %51 : vector<8x32xf32>
    %53 = arith.mulf %43, %52 : vector<8x32xf32>
    %cst_22 = arith.constant 0.000000e+00 : f32
    %54 = vector.broadcast %cst_22 : f32 to vector<8x32xf32>
    %55 = arith.maximumf %53, %54 : vector<8x32xf32>
    %c0_23 = arith.constant 0 : index
    %c32 = arith.constant 32 : index
    %56 = vector.load %arg13[%c0_23, %c32] : memref<8x256xf32, #tpu.memory_space<vmem>>, vector<8x32xf32>
    tpu.vector_store %arg13[%c0_23, %c32], %55 {strides = array<i32>} : memref<8x256xf32, #tpu.memory_space<vmem>>, vector<8x32xf32>,
    %57 = vector.extract_strided_slice %5 {offsets = [16, 0], sizes = [8, 128], strides = [1, 1]} : vector<64x128xf32> to vector<8x128xf32>
    %cst_24 = arith.constant dense<0.000000e+00> : vector<8x128xf32>
    %58 = tpu.matmul %53, %6, %cst_24 {dimension_numbers = #tpu.dot_dimension_numbers<[1], [0], [0], [1], [0, 0, 1, 1], [], []>} : vector<8x32xf32>, vector<32x128xf32>, vector<8x128xf32> -> vector<8x128xf32>
    %59 = arith.addf %57, %58 : vector<8x128xf32>
    %60 = arith.negf %59 : vector<8x128xf32>
    %61 = math.exp %60 : vector<8x128xf32>
    %cst_25 = arith.constant 1.000000e+00 : f32
    %62 = vector.broadcast %cst_25 : f32 to vector<8x128xf32>
    %63 = arith.addf %62, %61 : vector<8x128xf32>
    %64 = arith.divf %62, %63 : vector<8x128xf32>
    %65 = vector.extract_strided_slice %64 {offsets = [0, 0], sizes = [8, 32], strides = [1, 1]} : vector<8x128xf32> to vector<8x32xf32>
    %66 = vector.extract_strided_slice %64 {offsets = [0, 32], sizes = [8, 32], strides = [1, 1]} : vector<8x128xf32> to vector<8x32xf32>
    %67 = vector.extract_strided_slice %64 {offsets = [0, 64], sizes = [8, 32], strides = [1, 1]} : vector<8x128xf32> to vector<8x32xf32>
    %68 = vector.extract_strided_slice %64 {offsets = [0, 96], sizes = [8, 32], strides = [1, 1]} : vector<8x128xf32> to vector<8x32xf32>
    %cst_26 = arith.constant 2.000000e+00 : f32
    %69 = vector.broadcast %cst_26 : f32 to vector<8x32xf32>
    %70 = arith.mulf %69, %68 : vector<8x32xf32>
    %cst_27 = arith.constant 1.000000e+00 : f32
    %71 = vector.broadcast %cst_27 : f32 to vector<8x32xf32>
    %72 = arith.subf %70, %71 : vector<8x32xf32>
    %73 = arith.mulf %66, %51 : vector<8x32xf32>
    %74 = arith.mulf %65, %72 : vector<8x32xf32>
    %75 = arith.addf %73, %74 : vector<8x32xf32>
    %76 = math.tanh %75 : vector<8x32xf32>
    %77 = arith.mulf %67, %76 : vector<8x32xf32>
    %cst_28 = arith.constant 0.000000e+00 : f32
    %78 = vector.broadcast %cst_28 : f32 to vector<8x32xf32>
    %79 = arith.maximumf %77, %78 : vector<8x32xf32>
    %c0_29 = arith.constant 0 : index
    %c64 = arith.constant 64 : index
    %80 = vector.load %arg13[%c0_29, %c64] : memref<8x256xf32, #tpu.memory_space<vmem>>, vector<8x32xf32>
    tpu.vector_store %arg13[%c0_29, %c64], %79 {strides = array<i32>} : memref<8x256xf32, #tpu.memory_space<vmem>>, vector<8x32xf32>,
    %81 = vector.extract_strided_slice %5 {offsets = [24, 0], sizes = [8, 128], strides = [1, 1]} : vector<64x128xf32> to vector<8x128xf32>
    %cst_30 = arith.constant dense<0.000000e+00> : vector<8x128xf32>
    %82 = tpu.matmul %77, %6, %cst_30 {dimension_numbers = #tpu.dot_dimension_numbers<[1], [0], [0], [1], [0, 0, 1, 1], [], []>} : vector<8x32xf32>, vector<32x128xf32>, vector<8x128xf32> -> vector<8x128xf32>
    %83 = arith.addf %81, %82 : vector<8x128xf32>
    %84 = arith.negf %83 : vector<8x128xf32>
    %85 = math.exp %84 : vector<8x128xf32>
    %cst_31 = arith.constant 1.000000e+00 : f32
    %86 = vector.broadcast %cst_31 : f32 to vector<8x128xf32>
    %87 = arith.addf %86, %85 : vector<8x128xf32>
    %88 = arith.divf %86, %87 : vector<8x128xf32>
    %89 = vector.extract_strided_slice %88 {offsets = [0, 0], sizes = [8, 32], strides = [1, 1]} : vector<8x128xf32> to vector<8x32xf32>
    %90 = vector.extract_strided_slice %88 {offsets = [0, 32], sizes = [8, 32], strides = [1, 1]} : vector<8x128xf32> to vector<8x32xf32>
    %91 = vector.extract_strided_slice %88 {offsets = [0, 64], sizes = [8, 32], strides = [1, 1]} : vector<8x128xf32> to vector<8x32xf32>
    %92 = vector.extract_strided_slice %88 {offsets = [0, 96], sizes = [8, 32], strides = [1, 1]} : vector<8x128xf32> to vector<8x32xf32>
    %cst_32 = arith.constant 2.000000e+00 : f32
    %93 = vector.broadcast %cst_32 : f32 to vector<8x32xf32>
    %94 = arith.mulf %93, %92 : vector<8x32xf32>
    %cst_33 = arith.constant 1.000000e+00 : f32
    %95 = vector.broadcast %cst_33 : f32 to vector<8x32xf32>
    %96 = arith.subf %94, %95 : vector<8x32xf32>
    %97 = arith.mulf %90, %75 : vector<8x32xf32>
    %98 = arith.mulf %89, %96 : vector<8x32xf32>
    %99 = arith.addf %97, %98 : vector<8x32xf32>
    %100 = math.tanh %99 : vector<8x32xf32>
    %101 = arith.mulf %91, %100 : vector<8x32xf32>
    %cst_34 = arith.constant 0.000000e+00 : f32
    %102 = vector.broadcast %cst_34 : f32 to vector<8x32xf32>
    %103 = arith.maximumf %101, %102 : vector<8x32xf32>
    %c0_35 = arith.constant 0 : index
    %c96 = arith.constant 96 : index
    %104 = vector.load %arg13[%c0_35, %c96] : memref<8x256xf32, #tpu.memory_space<vmem>>, vector<8x32xf32>
    tpu.vector_store %arg13[%c0_35, %c96], %103 {strides = array<i32>} : memref<8x256xf32, #tpu.memory_space<vmem>>, vector<8x32xf32>,
    %105 = vector.extract_strided_slice %5 {offsets = [32, 0], sizes = [8, 128], strides = [1, 1]} : vector<64x128xf32> to vector<8x128xf32>
    %cst_36 = arith.constant dense<0.000000e+00> : vector<8x128xf32>
    %106 = tpu.matmul %101, %6, %cst_36 {dimension_numbers = #tpu.dot_dimension_numbers<[1], [0], [0], [1], [0, 0, 1, 1], [], []>} : vector<8x32xf32>, vector<32x128xf32>, vector<8x128xf32> -> vector<8x128xf32>
    %107 = arith.addf %105, %106 : vector<8x128xf32>
    %108 = arith.negf %107 : vector<8x128xf32>
    %109 = math.exp %108 : vector<8x128xf32>
    %cst_37 = arith.constant 1.000000e+00 : f32
    %110 = vector.broadcast %cst_37 : f32 to vector<8x128xf32>
    %111 = arith.addf %110, %109 : vector<8x128xf32>
    %112 = arith.divf %110, %111 : vector<8x128xf32>
    %113 = vector.extract_strided_slice %112 {offsets = [0, 0], sizes = [8, 32], strides = [1, 1]} : vector<8x128xf32> to vector<8x32xf32>
    %114 = vector.extract_strided_slice %112 {offsets = [0, 32], sizes = [8, 32], strides = [1, 1]} : vector<8x128xf32> to vector<8x32xf32>
    %115 = vector.extract_strided_slice %112 {offsets = [0, 64], sizes = [8, 32], strides = [1, 1]} : vector<8x128xf32> to vector<8x32xf32>
    %116 = vector.extract_strided_slice %112 {offsets = [0, 96], sizes = [8, 32], strides = [1, 1]} : vector<8x128xf32> to vector<8x32xf32>
    %cst_38 = arith.constant 2.000000e+00 : f32
    %117 = vector.broadcast %cst_38 : f32 to vector<8x32xf32>
    %118 = arith.mulf %117, %116 : vector<8x32xf32>
    %cst_39 = arith.constant 1.000000e+00 : f32
    %119 = vector.broadcast %cst_39 : f32 to vector<8x32xf32>
    %120 = arith.subf %118, %119 : vector<8x32xf32>
    %121 = arith.mulf %114, %99 : vector<8x32xf32>
    %122 = arith.mulf %113, %120 : vector<8x32xf32>
    %123 = arith.addf %121, %122 : vector<8x32xf32>
    %124 = math.tanh %123 : vector<8x32xf32>
    %125 = arith.mulf %115, %124 : vector<8x32xf32>
    %cst_40 = arith.constant 0.000000e+00 : f32
    %126 = vector.broadcast %cst_40 : f32 to vector<8x32xf32>
    %127 = arith.maximumf %125, %126 : vector<8x32xf32>
    %c0_41 = arith.constant 0 : index
    %c128 = arith.constant 128 : index
    %128 = vector.load %arg13[%c0_41, %c128] : memref<8x256xf32, #tpu.memory_space<vmem>>, vector<8x32xf32>
    tpu.vector_store %arg13[%c0_41, %c128], %127 {strides = array<i32>} : memref<8x256xf32, #tpu.memory_space<vmem>>, vector<8x32xf32>,
    %129 = vector.extract_strided_slice %5 {offsets = [40, 0], sizes = [8, 128], strides = [1, 1]} : vector<64x128xf32> to vector<8x128xf32>
    %cst_42 = arith.constant dense<0.000000e+00> : vector<8x128xf32>
    %130 = tpu.matmul %125, %6, %cst_42 {dimension_numbers = #tpu.dot_dimension_numbers<[1], [0], [0], [1], [0, 0, 1, 1], [], []>} : vector<8x32xf32>, vector<32x128xf32>, vector<8x128xf32> -> vector<8x128xf32>
    %131 = arith.addf %129, %130 : vector<8x128xf32>
    %132 = arith.negf %131 : vector<8x128xf32>
    %133 = math.exp %132 : vector<8x128xf32>
    %cst_43 = arith.constant 1.000000e+00 : f32
    %134 = vector.broadcast %cst_43 : f32 to vector<8x128xf32>
    %135 = arith.addf %134, %133 : vector<8x128xf32>
    %136 = arith.divf %134, %135 : vector<8x128xf32>
    %137 = vector.extract_strided_slice %136 {offsets = [0, 0], sizes = [8, 32], strides = [1, 1]} : vector<8x128xf32> to vector<8x32xf32>
    %138 = vector.extract_strided_slice %136 {offsets = [0, 32], sizes = [8, 32], strides = [1, 1]} : vector<8x128xf32> to vector<8x32xf32>
    %139 = vector.extract_strided_slice %136 {offsets = [0, 64], sizes = [8, 32], strides = [1, 1]} : vector<8x128xf32> to vector<8x32xf32>
    %140 = vector.extract_strided_slice %136 {offsets = [0, 96], sizes = [8, 32], strides = [1, 1]} : vector<8x128xf32> to vector<8x32xf32>
    %cst_44 = arith.constant 2.000000e+00 : f32
    %141 = vector.broadcast %cst_44 : f32 to vector<8x32xf32>
    %142 = arith.mulf %141, %140 : vector<8x32xf32>
    %cst_45 = arith.constant 1.000000e+00 : f32
    %143 = vector.broadcast %cst_45 : f32 to vector<8x32xf32>
    %144 = arith.subf %142, %143 : vector<8x32xf32>
    %145 = arith.mulf %138, %123 : vector<8x32xf32>
    %146 = arith.mulf %137, %144 : vector<8x32xf32>
    %147 = arith.addf %145, %146 : vector<8x32xf32>
    %148 = math.tanh %147 : vector<8x32xf32>
    %149 = arith.mulf %139, %148 : vector<8x32xf32>
    %cst_46 = arith.constant 0.000000e+00 : f32
    %150 = vector.broadcast %cst_46 : f32 to vector<8x32xf32>
    %151 = arith.maximumf %149, %150 : vector<8x32xf32>
    %c0_47 = arith.constant 0 : index
    %c160 = arith.constant 160 : index
    %152 = vector.load %arg13[%c0_47, %c160] : memref<8x256xf32, #tpu.memory_space<vmem>>, vector<8x32xf32>
    tpu.vector_store %arg13[%c0_47, %c160], %151 {strides = array<i32>} : memref<8x256xf32, #tpu.memory_space<vmem>>, vector<8x32xf32>,
    %153 = vector.extract_strided_slice %5 {offsets = [48, 0], sizes = [8, 128], strides = [1, 1]} : vector<64x128xf32> to vector<8x128xf32>
    %cst_48 = arith.constant dense<0.000000e+00> : vector<8x128xf32>
    %154 = tpu.matmul %149, %6, %cst_48 {dimension_numbers = #tpu.dot_dimension_numbers<[1], [0], [0], [1], [0, 0, 1, 1], [], []>} : vector<8x32xf32>, vector<32x128xf32>, vector<8x128xf32> -> vector<8x128xf32>
    %155 = arith.addf %153, %154 : vector<8x128xf32>
    %156 = arith.negf %155 : vector<8x128xf32>
    %157 = math.exp %156 : vector<8x128xf32>
    %cst_49 = arith.constant 1.000000e+00 : f32
    %158 = vector.broadcast %cst_49 : f32 to vector<8x128xf32>
    %159 = arith.addf %158, %157 : vector<8x128xf32>
    %160 = arith.divf %158, %159 : vector<8x128xf32>
    %161 = vector.extract_strided_slice %160 {offsets = [0, 0], sizes = [8, 32], strides = [1, 1]} : vector<8x128xf32> to vector<8x32xf32>
    %162 = vector.extract_strided_slice %160 {offsets = [0, 32], sizes = [8, 32], strides = [1, 1]} : vector<8x128xf32> to vector<8x32xf32>
    %163 = vector.extract_strided_slice %160 {offsets = [0, 64], sizes = [8, 32], strides = [1, 1]} : vector<8x128xf32> to vector<8x32xf32>
    %164 = vector.extract_strided_slice %160 {offsets = [0, 96], sizes = [8, 32], strides = [1, 1]} : vector<8x128xf32> to vector<8x32xf32>
    %cst_50 = arith.constant 2.000000e+00 : f32
    %165 = vector.broadcast %cst_50 : f32 to vector<8x32xf32>
    %166 = arith.mulf %165, %164 : vector<8x32xf32>
    %cst_51 = arith.constant 1.000000e+00 : f32
    %167 = vector.broadcast %cst_51 : f32 to vector<8x32xf32>
    %168 = arith.subf %166, %167 : vector<8x32xf32>
    %169 = arith.mulf %162, %147 : vector<8x32xf32>
    %170 = arith.mulf %161, %168 : vector<8x32xf32>
    %171 = arith.addf %169, %170 : vector<8x32xf32>
    %172 = math.tanh %171 : vector<8x32xf32>
    %173 = arith.mulf %163, %172 : vector<8x32xf32>
    %cst_52 = arith.constant 0.000000e+00 : f32
    %174 = vector.broadcast %cst_52 : f32 to vector<8x32xf32>
    %175 = arith.maximumf %173, %174 : vector<8x32xf32>
    %c0_53 = arith.constant 0 : index
    %c192 = arith.constant 192 : index
    %176 = vector.load %arg13[%c0_53, %c192] : memref<8x256xf32, #tpu.memory_space<vmem>>, vector<8x32xf32>
    tpu.vector_store %arg13[%c0_53, %c192], %175 {strides = array<i32>} : memref<8x256xf32, #tpu.memory_space<vmem>>, vector<8x32xf32>,
    %177 = vector.extract_strided_slice %5 {offsets = [56, 0], sizes = [8, 128], strides = [1, 1]} : vector<64x128xf32> to vector<8x128xf32>
    %cst_54 = arith.constant dense<0.000000e+00> : vector<8x128xf32>
    %178 = tpu.matmul %173, %6, %cst_54 {dimension_numbers = #tpu.dot_dimension_numbers<[1], [0], [0], [1], [0, 0, 1, 1], [], []>} : vector<8x32xf32>, vector<32x128xf32>, vector<8x128xf32> -> vector<8x128xf32>
    %179 = arith.addf %177, %178 : vector<8x128xf32>
    %180 = arith.negf %179 : vector<8x128xf32>
    %181 = math.exp %180 : vector<8x128xf32>
    %cst_55 = arith.constant 1.000000e+00 : f32
    %182 = vector.broadcast %cst_55 : f32 to vector<8x128xf32>
    %183 = arith.addf %182, %181 : vector<8x128xf32>
    %184 = arith.divf %182, %183 : vector<8x128xf32>
    %185 = vector.extract_strided_slice %184 {offsets = [0, 0], sizes = [8, 32], strides = [1, 1]} : vector<8x128xf32> to vector<8x32xf32>
    %186 = vector.extract_strided_slice %184 {offsets = [0, 32], sizes = [8, 32], strides = [1, 1]} : vector<8x128xf32> to vector<8x32xf32>
    %187 = vector.extract_strided_slice %184 {offsets = [0, 64], sizes = [8, 32], strides = [1, 1]} : vector<8x128xf32> to vector<8x32xf32>
    %188 = vector.extract_strided_slice %184 {offsets = [0, 96], sizes = [8, 32], strides = [1, 1]} : vector<8x128xf32> to vector<8x32xf32>
    %cst_56 = arith.constant 2.000000e+00 : f32
    %189 = vector.broadcast %cst_56 : f32 to vector<8x32xf32>
    %190 = arith.mulf %189, %188 : vector<8x32xf32>
    %cst_57 = arith.constant 1.000000e+00 : f32
    %191 = vector.broadcast %cst_57 : f32 to vector<8x32xf32>
    %192 = arith.subf %190, %191 : vector<8x32xf32>
    %193 = arith.mulf %186, %171 : vector<8x32xf32>
    %194 = arith.mulf %185, %192 : vector<8x32xf32>
    %195 = arith.addf %193, %194 : vector<8x32xf32>
    %196 = math.tanh %195 : vector<8x32xf32>
    %197 = arith.mulf %187, %196 : vector<8x32xf32>
    %cst_58 = arith.constant 0.000000e+00 : f32
    %198 = vector.broadcast %cst_58 : f32 to vector<8x32xf32>
    %199 = arith.maximumf %197, %198 : vector<8x32xf32>
    %c0_59 = arith.constant 0 : index
    %c224 = arith.constant 224 : index
    %200 = vector.load %arg13[%c0_59, %c224] : memref<8x256xf32, #tpu.memory_space<vmem>>, vector<8x32xf32>
    tpu.vector_store %arg13[%c0_59, %c224], %199 {strides = array<i32>} : memref<8x256xf32, #tpu.memory_space<vmem>>, vector<8x32xf32>,
    %c0_60 = arith.constant 0 : index
    %c0_61 = arith.constant 0 : index
    %201 = vector.load %arg13[%c0_60, %c0_61] : memref<8x256xf32, #tpu.memory_space<vmem>>, vector<8x256xf32>
    %c0_62 = arith.constant 0 : index
    %c0_63 = arith.constant 0 : index
    %202 = vector.load %arg6[%c0_62, %c0_63] : memref<256x32xf32, #tpu.memory_space<vmem>>, vector<256x32xf32>
    %cst_64 = arith.constant dense<0.000000e+00> : vector<8x32xf32>
    %203 = tpu.matmul %201, %202, %cst_64 {dimension_numbers = #tpu.dot_dimension_numbers<[1], [0], [0], [1], [0, 0, 1, 1], [], []>} : vector<8x256xf32>, vector<256x32xf32>, vector<8x32xf32> -> vector<8x32xf32>
    %c0_65 = arith.constant 0 : index
    %c0_66 = arith.constant 0 : index
    %204 = vector.load %arg7[%c0_65, %c0_66] : memref<1x32xf32, #tpu.memory_space<vmem>>, vector<1x32xf32>
    %205 = vector.broadcast %204 : vector<1x32xf32> to vector<8x32xf32>
    %206 = arith.addf %203, %205 : vector<8x32xf32>
    %cst_67 = arith.constant 0.000000e+00 : f32
    %207 = vector.broadcast %cst_67 : f32 to vector<8x32xf32>
    %208 = arith.maximumf %206, %207 : vector<8x32xf32>
    %c0_68 = arith.constant 0 : index
    %c0_69 = arith.constant 0 : index
    %209 = vector.load %arg8[%c0_68, %c0_69] : memref<32x16xf32, #tpu.memory_space<vmem>>, vector<32x16xf32>
    %cst_70 = arith.constant dense<0.000000e+00> : vector<8x16xf32>
    %210 = tpu.matmul %208, %209, %cst_70 {dimension_numbers = #tpu.dot_dimension_numbers<[1], [0], [0], [1], [0, 0, 1, 1], [], []>} : vector<8x32xf32>, vector<32x16xf32>, vector<8x16xf32> -> vector<8x16xf32>
    %c0_71 = arith.constant 0 : index
    %c0_72 = arith.constant 0 : index
    %211 = vector.load %arg9[%c0_71, %c0_72] : memref<1x16xf32, #tpu.memory_space<vmem>>, vector<1x16xf32>
    %212 = vector.broadcast %211 : vector<1x16xf32> to vector<8x16xf32>
    %213 = arith.addf %210, %212 : vector<8x16xf32>
    %cst_73 = arith.constant 0.000000e+00 : f32
    %214 = vector.broadcast %cst_73 : f32 to vector<8x16xf32>
    %215 = arith.maximumf %213, %214 : vector<8x16xf32>
    %c0_74 = arith.constant 0 : index
    %c0_75 = arith.constant 0 : index
    %216 = vector.load %arg10[%c0_74, %c0_75] : memref<16x4xf32, #tpu.memory_space<vmem>>, vector<16x4xf32>
    %cst_76 = arith.constant dense<0.000000e+00> : vector<8x4xf32>
    %217 = tpu.matmul %215, %216, %cst_76 {dimension_numbers = #tpu.dot_dimension_numbers<[1], [0], [0], [1], [0, 0, 1, 1], [], []>} : vector<8x16xf32>, vector<16x4xf32>, vector<8x4xf32> -> vector<8x4xf32>
    %c0_77 = arith.constant 0 : index
    %c0_78 = arith.constant 0 : index
    %218 = vector.load %arg11[%c0_77, %c0_78] : memref<1x4xf32, #tpu.memory_space<vmem>>, vector<1x4xf32>
    %219 = vector.broadcast %218 : vector<1x4xf32> to vector<8x4xf32>
    %220 = arith.addf %217, %219 : vector<8x4xf32>
    %cst_79 = arith.constant dense<0xFF800000> : vector<8xf32>
    %221 = vector.multi_reduction <maximumf>, %220, %cst_79 [1] : vector<8x4xf32> to vector<8xf32>
    %222 = vector.shape_cast %221 : vector<8xf32> to vector<8x1xf32>
    %223 = vector.broadcast %222 : vector<8x1xf32> to vector<8x4xf32>
    %224 = arith.subf %220, %223 : vector<8x4xf32>
    %225 = math.exp %224 : vector<8x4xf32>
    %cst_80 = arith.constant dense<0.000000e+00> : vector<8xf32>
    %226 = vector.multi_reduction <add>, %225, %cst_80 [1] : vector<8x4xf32> to vector<8xf32>
    %227 = vector.shape_cast %226 : vector<8xf32> to vector<8x1xf32>
    %228 = vector.broadcast %227 : vector<8x1xf32> to vector<8x4xf32>
    %229 = arith.divf %225, %228 : vector<8x4xf32>
    %c0_81 = arith.constant 0 : index
    %c0_82 = arith.constant 0 : index
    %230 = vector.load %arg12[%c0_81, %c0_82] : memref<8x4xf32, #tpu.memory_space<vmem>>, vector<8x4xf32>
    tpu.vector_store %arg12[%c0_81, %c0_82], %229 {strides = array<i32>} : memref<8x4xf32, #tpu.memory_space<vmem>>, vector<8x4xf32>,
    return
  }
}

</mosaic_0001>

<llo_original>
// kernel: tpu_custom_call.1
$region0: #{tpu_custom_call.1}
  #allocation0 [shape = 'u32[]', space=smem, size = 0x4, offset = 0x4, fixed_abs, tag = 'smem constant byte address 0x4 - core index']
  #allocation1 [shape = 'u32[72,128]{1,0:T(1,128)}', space=vmem, size = 0x9000, scoped, tag = 'internal scratch']
  #allocation2 [shape = 'f32[8,256]{1,0:T(8,128)}', space=vmem, size = 0x2000, scoped, tag = 'scratch operand']
  %s0 = inlined_call_operand.vmem [shape: f32[64,16], index: 0, kind: input, shape index: {}]
  %s1 = inlined_call_operand.vmem [shape: f32[16,128], index: 1, kind: input, shape index: {}]
  %s2 = inlined_call_operand.vmem [shape: f32[32,128], index: 2, kind: input, shape index: {}]
  %s3 = inlined_call_operand.vmem [shape: f32[1,128], index: 3, kind: input, shape index: {}]
  %s4 = inlined_call_operand.vmem [shape: f32[8,32], index: 4, kind: input, shape index: {}]
  %s5 = inlined_call_operand.vmem [shape: f32[8,32], index: 5, kind: input, shape index: {}]
  %s6 = inlined_call_operand.vmem [shape: f32[256,32], index: 6, kind: input, shape index: {}]
  %s7 = inlined_call_operand.vmem [shape: f32[1,32], index: 7, kind: input, shape index: {}]
  %s8 = inlined_call_operand.vmem [shape: f32[32,16], index: 8, kind: input, shape index: {}]
  %s9 = inlined_call_operand.vmem [shape: f32[1,16], index: 9, kind: input, shape index: {}]
  %s10 = inlined_call_operand.vmem [shape: f32[16,4], index: 10, kind: input, shape index: {}]
  %s11 = inlined_call_operand.vmem [shape: f32[1,4], index: 11, kind: input, shape index: {}]
  %s12 = inlined_call_operand.vmem [shape: f32[8,4], index: 12, kind: output, shape index: {}]
  %s13 = sld [smem:[#allocation0]]
  $region58: #{tpu_custom_call.1} parent=0
    _
  %s15 = ssub.s32 1, %s13
  %s16 = scalar_select 0, %s15, %s13
  // Predicated region
  $region2: #{tpu_custom_call.1} parent=0 // pred_check
    _
  $region3: #{tpu_custom_call.1} parent=0 // pred_check_branch
    %18 = sbr.rel (0) target = $region5
  $region4: #{tpu_custom_call.1} parent=0 // pred_region
    _
  $region5: #{tpu_custom_call.1} parent=0 // pred_fallthru
    _
  // Predicated region
  $region6: #{tpu_custom_call.1} parent=0 // pred_check
    _
  $region7: #{tpu_custom_call.1} parent=0 // pred_check_branch
    %20 = sbr.rel (0) target = $region9
  $region8: #{tpu_custom_call.1} parent=0 // pred_region
    _
  $region9: #{tpu_custom_call.1} parent=0 // pred_fallthru
    _
  // Predicated region
  $region10: #{tpu_custom_call.1} parent=0 // pred_check
    _
  $region11: #{tpu_custom_call.1} parent=0 // pred_check_branch
    %22 = sbr.rel (0) target = $region13
  $region12: #{tpu_custom_call.1} parent=0 // pred_region
    _
  $region13: #{tpu_custom_call.1} parent=0 // pred_fallthru
    _
  // Predicated region
  $region14: #{tpu_custom_call.1} parent=0 // pred_check
    _
  $region15: #{tpu_custom_call.1} parent=0 // pred_check_branch
    %24 = sbr.rel (0) target = $region17
  $region16: #{tpu_custom_call.1} parent=0 // pred_region
    _
  $region17: #{tpu_custom_call.1} parent=0 // pred_fallthru
    _
  // Predicated region
  $region18: #{tpu_custom_call.1} parent=0 // pred_check
    _
  $region19: #{tpu_custom_call.1} parent=0 // pred_check_branch
    %26 = sbr.rel (0) target = $region21
  $region20: #{tpu_custom_call.1} parent=0 // pred_region
    _
  $region21: #{tpu_custom_call.1} parent=0 // pred_fallthru
    _
  // Predicated region
  $region22: #{tpu_custom_call.1} parent=0 // pred_check
    _
  $region23: #{tpu_custom_call.1} parent=0 // pred_check_branch
    %28 = sbr.rel (0) target = $region25
  $region24: #{tpu_custom_call.1} parent=0 // pred_region
    _
  $region25: #{tpu_custom_call.1} parent=0 // pred_fallthru
    _
  // Predicated region
  $region26: #{tpu_custom_call.1} parent=0 // pred_check
    _
  $region27: #{tpu_custom_call.1} parent=0 // pred_check_branch
    %30 = sbr.rel (0) target = $region29
  $region28: #{tpu_custom_call.1} parent=0 // pred_region
    _
  $region29: #{tpu_custom_call.1} parent=0 // pred_fallthru
    _
  // Predicated region
  $region30: #{tpu_custom_call.1} parent=0 // pred_check
    _
  $region31: #{tpu_custom_call.1} parent=0 // pred_check_branch
    %32 = sbr.rel (0) target = $region33
  $region32: #{tpu_custom_call.1} parent=0 // pred_region
    _
  $region33: #{tpu_custom_call.1} parent=0 // pred_fallthru
    _
  // Predicated region
  $region34: #{tpu_custom_call.1} parent=0 // pred_check
    _
  $region35: #{tpu_custom_call.1} parent=0 // pred_check_branch
    %34 = sbr.rel (0) target = $region37
  $region36: #{tpu_custom_call.1} parent=0 // pred_region
    _
  $region37: #{tpu_custom_call.1} parent=0 // pred_fallthru
    _
  // Predicated region
  $region38: #{tpu_custom_call.1} parent=0 // pred_check
    _
  $region39: #{tpu_custom_call.1} parent=0 // pred_check_branch
    %36 = sbr.rel (0) target = $region41
  $region40: #{tpu_custom_call.1} parent=0 // pred_region
    _
  $region41: #{tpu_custom_call.1} parent=0 // pred_fallthru
    _
  // Predicated region
  $region42: #{tpu_custom_call.1} parent=0 // pred_check
    _
  $region43: #{tpu_custom_call.1} parent=0 // pred_check_branch
    %38 = sbr.rel (0) target = $region45
  $region44: #{tpu_custom_call.1} parent=0 // pred_region
    _
  $region45: #{tpu_custom_call.1} parent=0 // pred_fallthru
    _
  // Predicated region
  $region46: #{tpu_custom_call.1} parent=0 // pred_check
    _
  $region47: #{tpu_custom_call.1} parent=0 // pred_check_branch
    %40 = sbr.rel (0) target = $region49
  $region48: #{tpu_custom_call.1} parent=0 // pred_region
    _
  $region49: #{tpu_custom_call.1} parent=0 // pred_fallthru
    _
  %v41 = vld [vmem:[%s0] sm:$0xff]
  %v42 = vld [vmem:[%s0 + $0x8] sm:$0xff]
  %v43 = vld [vmem:[%s0 + $0x10] sm:$0xff]
  %v44 = vld [vmem:[%s0 + $0x18] sm:$0xff]
  %v45 = vld [vmem:[%s0 + $0x20] sm:$0xff]
  %v46 = vld [vmem:[%s0 + $0x28] sm:$0xff]
  %v47 = vld [vmem:[%s0 + $0x30] sm:$0xff]
  %v48 = vld [vmem:[%s0 + $0x38] sm:$0xff]
  %v49 = vld [vmem:[%s1] sm:$0xff]
  %v50 = vld [vmem:[%s1 + $0x8] sm:$0xff]
  %v51 = vld [vmem:[%s3] sm:$0x1]
  %v53 = vperm.slane %v51, 0
  %vm55 = vcmask 130048
  %v57 = vsel %vm55, %v41, 0
  %v60 = vsel %vm55, %v42, 0
  %v63 = vsel %vm55, %v43, 0
  %v66 = vsel %vm55, %v44, 0
  %v69 = vsel %vm55, %v45, 0
  %v72 = vsel %vm55, %v46, 0
  %v75 = vsel %vm55, %v47, 0
  %v78 = vsel %vm55, %v48, 0
  %80 = vmatpush.msra.mxu0 0.0
  %81 = vmatpush.msra.mxu0 0.0
  %82 = vmatpush.msra.mxu0 0.0
  %83 = vmatpush.msra.mxu0 0.0
  %84 = vmatpush.msra.mxu0 0.0
  %85 = vmatpush.msra.mxu0 0.0
  %86 = vmatpush.msra.mxu0 0.0
  %87 = vmatpush.msra.mxu0 0.0
  %88 = vmatpush.msra.mxu0 0.0
  %89 = vmatpush.msra.mxu0 0.0
  %90 = vmatpush.msra.mxu0 0.0
  %91 = vmatpush.msra.mxu0 0.0
  %92 = vmatpush.msra.mxu0 0.0
  %93 = vmatpush.msra.mxu0 0.0
  %94 = vmatpush.msra.mxu0 %v50
  %95 = vmatpush.msra.mxu0 %v49
  %96 = vmatmul.f32.gmra.mxu0 %v57
  %v97 = vpop.f32.mrf.mxu0
  %v98 = vadd.f32 %v53, %v97
  %99 = vmatmul.f32.gmra.mxu0 %v60
  %v100 = vpop.f32.mrf.mxu0
  %v101 = vadd.f32 %v53, %v100
  %102 = vmatmul.f32.gmra.mxu0 %v63
  %v103 = vpop.f32.mrf.mxu0
  %v104 = vadd.f32 %v53, %v103
  %105 = vmatmul.f32.gmra.mxu0 %v66
  %v106 = vpop.f32.mrf.mxu0
  %v107 = vadd.f32 %v53, %v106
  %108 = vmatmul.f32.gmra.mxu0 %v69
  %v109 = vpop.f32.mrf.mxu0
  %v110 = vadd.f32 %v53, %v109
  %111 = vmatmul.f32.gmra.mxu0 %v72
  %v112 = vpop.f32.mrf.mxu0
  %v113 = vadd.f32 %v53, %v112
  %114 = vmatmul.f32.gmra.mxu0 %v75
  %v115 = vpop.f32.mrf.mxu0
  %v116 = vadd.f32 %v53, %v115
  %117 = vmatmul.f32.gmra.mxu0 %v78
  %v118 = vpop.f32.mrf.mxu0
  %v119 = vadd.f32 %v53, %v118
  %120 = vdwg.mxu0
  %v121 = vld [vmem:[%s2] sm:$0xff]
  %v122 = vld [vmem:[%s2 + $0x8] sm:$0xff]
  %v123 = vld [vmem:[%s2 + $0x10] sm:$0xff]
  %v124 = vld [vmem:[%s2 + $0x18] sm:$0xff]
  %v125 = vld [vmem:[%s4] sm:$0xff]
  %v126 = vld [vmem:[%s5] sm:$0xff]
  %vm127 = vcmask 261120
  %v129 = vsel %vm127, %v125, 0
  %131 = vmatpush.msra.mxu0 0.0
  %132 = vmatpush.msra.mxu0 0.0
  %133 = vmatpush.msra.mxu0 0.0
  %134 = vmatpush.msra.mxu0 0.0
  %135 = vmatpush.msra.mxu0 0.0
  %136 = vmatpush.msra.mxu0 0.0
  %137 = vmatpush.msra.mxu0 0.0
  %138 = vmatpush.msra.mxu0 0.0
  %139 = vmatpush.msra.mxu0 0.0
  %140 = vmatpush.msra.mxu0 0.0
  %141 = vmatpush.msra.mxu0 0.0
  %142 = vmatpush.msra.mxu0 0.0
  %143 = vmatpush.msra.mxu0 %v124
  %144 = vmatpush.msra.mxu0 %v123
  %145 = vmatpush.msra.mxu0 %v122
  %146 = vmatpush.msra.mxu0 %v121
  %147 = vmatmul.f32.gmra.mxu0 %v129
  %v148 = vpop.f32.mrf.mxu0
  %v149 = vadd.f32 0.0, %v148
  %150 = vdwg.mxu0
  %v151 = vadd.f32 %v98, %v149
  %v152 = vxor.u32 %v151, 2147483648
  %v153 = vmul.f32 %v152, 1.442695
  %v154 = vpow.pop %v153
  %v155 = vadd.f32 %v154, 1.0
  %v156 = vrcp.pop %v155
  %v157 = vmul.f32 %v155, %v156
  %v158 = vsub.f32 1.0, %v157
  %v159 = vmul.f32 %v156, %v158
  %v160 = vadd.f32 %v156, %v159
  %vm161 = vweird.f32 %v155
  %vm162 = vweird.f32 %v156
  %vm163 = vmor %vm161, %vm162
  %v164 = vsel %vm163, %v156, %v160
  %v165 = vand.u32 2147483647, %v155
  %vm166 = vcmp.eq.f32.partialorder %v165, 8.507059e+37
  %v167 = vand.u32 %v155, 2147483648
  %v168 = vor.u32 1.1754944e-38, %v167
  %v169 = vsel %vm166, %v168, %v164
  %v170 = vmul.f32 1.0, %v169
  %v171 = vmul.f32 %v170, 2.0
  %v172 = vsub.f32 %v171, 1.0
  %174 = vrot.lane.b32.xlu0 %v126, 32
  %v175 = vpop.permute.xlu0 %174
  %v177 = vmul.f32 %v170, %v175
  %179 = vrot.lane.b32.xlu0 %v172, 32
  %v180 = vpop.permute.xlu0 %179
  %v182 = vmul.f32 %v170, %v180
  %184 = vrot.lane.b32.xlu0 %v182, 32
  %v185 = vpop.permute.xlu0 %184
  %v187 = vadd.f32 %v177, %v185
  %v188 = vtanh.pop %v187
  %190 = vrot.lane.b32.xlu0 %v188, 32
  %v191 = vpop.permute.xlu0 %190
  %v193 = vmul.f32 %v170, %v191
  %v194 = vmax.f32 %v193, 0.0
  %196 = vrot.lane.b32.xlu0 %v194, 64
  %v197 = vpop.permute.xlu0 %196
  %199 = vst.msk [vmem:[#allocation2] sm:$0xff] %vm127, %v197
  %201 = vrot.lane.b32.xlu0 %v193, 64
  %v202 = vpop.permute.xlu0 %201
  %v203 = vsel %vm127, %v202, 0
  %205 = vmatpush.msra.mxu0 0.0
  %206 = vmatpush.msra.mxu0 0.0
  %207 = vmatpush.msra.mxu0 0.0
  %208 = vmatpush.msra.mxu0 0.0
  %209 = vmatpush.msra.mxu0 0.0
  %210 = vmatpush.msra.mxu0 0.0
  %211 = vmatpush.msra.mxu0 0.0
  %212 = vmatpush.msra.mxu0 0.0
  %213 = vmatpush.msra.mxu0 0.0
  %214 = vmatpush.msra.mxu0 0.0
  %215 = vmatpush.msra.mxu0 0.0
  %216 = vmatpush.msra.mxu0 0.0
  %217 = vmatpush.msra.mxu0 %v124
  %218 = vmatpush.msra.mxu0 %v123
  %219 = vmatpush.msra.mxu0 %v122
  %220 = vmatpush.msra.mxu0 %v121
  %221 = vmatmul.f32.gmra.mxu0 %v203
  %v222 = vpop.f32.mrf.mxu0
  %v223 = vadd.f32 0.0, %v222
  %224 = vdwg.mxu0
  %v225 = vadd.f32 %v101, %v223
  %v226 = vxor.u32 %v225, 2147483648
  %v227 = vmul.f32 %v226, 1.442695
  %v228 = vpow.pop %v227
  %v229 = vadd.f32 %v228, 1.0
  %v230 = vrcp.pop %v229
  %v231 = vmul.f32 %v229, %v230
  %v232 = vsub.f32 1.0, %v231
  %v233 = vmul.f32 %v230, %v232
  %v234 = vadd.f32 %v230, %v233
  %vm235 = vweird.f32 %v229
  %vm236 = vweird.f32 %v230
  %vm237 = vmor %vm235, %vm236
  %v238 = vsel %vm237, %v230, %v234
  %v239 = vand.u32 2147483647, %v229
  %vm240 = vcmp.eq.f32.partialorder %v239, 8.507059e+37
  %v241 = vand.u32 %v229, 2147483648
  %v242 = vor.u32 1.1754944e-38, %v241
  %v243 = vsel %vm240, %v242, %v238
  %v244 = vmul.f32 1.0, %v243
  %v245 = vmul.f32 %v244, 2.0
  %v246 = vsub.f32 %v245, 1.0
  %v247 = vmul.f32 %v244, %v187
  %249 = vrot.lane.b32.xlu0 %v246, 32
  %v250 = vpop.permute.xlu0 %249
  %v252 = vmul.f32 %v244, %v250
  %254 = vrot.lane.b32.xlu0 %v252, 32
  %v255 = vpop.permute.xlu0 %254
  %v257 = vadd.f32 %v247, %v255
  %v258 = vtanh.pop %v257
  %260 = vrot.lane.b32.xlu0 %v258, 32
  %v261 = vpop.permute.xlu0 %260
  %v263 = vmul.f32 %v244, %v261
  %v264 = vmax.f32 %v263, 0.0
  %266 = vrot.lane.b32.xlu0 %v264, 96
  %v267 = vpop.permute.xlu0 %266
  %vm269 = vcmask 523520
  %270 = vst.msk [vmem:[#allocation2] sm:$0xff] %vm269, %v267
  %272 = vrot.lane.b32.xlu0 %v263, 64
  %v273 = vpop.permute.xlu0 %272
  %v274 = vsel %vm127, %v273, 0
  %276 = vmatpush.msra.mxu0 0.0
  %277 = vmatpush.msra.mxu0 0.0
  %278 = vmatpush.msra.mxu0 0.0
  %279 = vmatpush.msra.mxu0 0.0
  %280 = vmatpush.msra.mxu0 0.0
  %281 = vmatpush.msra.mxu0 0.0
  %282 = vmatpush.msra.mxu0 0.0
  %283 = vmatpush.msra.mxu0 0.0
  %284 = vmatpush.msra.mxu0 0.0
  %285 = vmatpush.msra.mxu0 0.0
  %286 = vmatpush.msra.mxu0 0.0
  %287 = vmatpush.msra.mxu0 0.0
  %288 = vmatpush.msra.mxu0 %v124
  %289 = vmatpush.msra.mxu0 %v123
  %290 = vmatpush.msra.mxu0 %v122
  %291 = vmatpush.msra.mxu0 %v121
  %292 = vmatmul.f32.gmra.mxu0 %v274
  %v293 = vpop.f32.mrf.mxu0
  %v294 = vadd.f32 0.0, %v293
  %295 = vdwg.mxu0
  %v296 = vadd.f32 %v104, %v294
  %v297 = vxor.u32 %v296, 2147483648
  %v298 = vmul.f32 %v297, 1.442695
  %v299 = vpow.pop %v298
  %v300 = vadd.f32 %v299, 1.0
  %v301 = vrcp.pop %v300
  %v302 = vmul.f32 %v300, %v301
  %v303 = vsub.f32 1.0, %v302
  %v304 = vmul.f32 %v301, %v303
  %v305 = vadd.f32 %v301, %v304
  %vm306 = vweird.f32 %v300
  %vm307 = vweird.f32 %v301
  %vm308 = vmor %vm306, %vm307
  %v309 = vsel %vm308, %v301, %v305
  %v310 = vand.u32 2147483647, %v300
  %vm311 = vcmp.eq.f32.partialorder %v310, 8.507059e+37
  %v312 = vand.u32 %v300, 2147483648
  %v313 = vor.u32 1.1754944e-38, %v312
  %v314 = vsel %vm311, %v313, %v309
  %v315 = vmul.f32 1.0, %v314
  %v316 = vmul.f32 %v315, 2.0
  %v317 = vsub.f32 %v316, 1.0
  %v318 = vmul.f32 %v315, %v257
  %320 = vrot.lane.b32.xlu0 %v317, 32
  %v321 = vpop.permute.xlu0 %320
  %v323 = vmul.f32 %v315, %v321
  %325 = vrot.lane.b32.xlu0 %v323, 32
  %v326 = vpop.permute.xlu0 %325
  %v328 = vadd.f32 %v318, %v326
  %v329 = vtanh.pop %v328
  %331 = vrot.lane.b32.xlu0 %v329, 32
  %v332 = vpop.permute.xlu0 %331
  %v334 = vmul.f32 %v315, %v332
  %v335 = vmax.f32 %v334, 0.0
  %vm336 = vcmask 785920
  %337 = vst.msk [vmem:[#allocation2] sm:$0xff] %vm336, %v335
  %339 = vrot.lane.b32.xlu0 %v334, 64
  %v340 = vpop.permute.xlu0 %339
  %v341 = vsel %vm127, %v340, 0
  %343 = vmatpush.msra.mxu0 0.0
  %344 = vmatpush.msra.mxu0 0.0
  %345 = vmatpush.msra.mxu0 0.0
  %346 = vmatpush.msra.mxu0 0.0
  %347 = vmatpush.msra.mxu0 0.0
  %348 = vmatpush.msra.mxu0 0.0
  %349 = vmatpush.msra.mxu0 0.0
  %350 = vmatpush.msra.mxu0 0.0
  %351 = vmatpush.msra.mxu0 0.0
  %352 = vmatpush.msra.mxu0 0.0
  %353 = vmatpush.msra.mxu0 0.0
  %354 = vmatpush.msra.mxu0 0.0
  %355 = vmatpush.msra.mxu0 %v124
  %356 = vmatpush.msra.mxu0 %v123
  %357 = vmatpush.msra.mxu0 %v122
  %358 = vmatpush.msra.mxu0 %v121
  %359 = vmatmul.f32.gmra.mxu0 %v341
  %v360 = vpop.f32.mrf.mxu0
  %v361 = vadd.f32 0.0, %v360
  %362 = vdwg.mxu0
  %v363 = vadd.f32 %v107, %v361
  %v364 = vxor.u32 %v363, 2147483648
  %v365 = vmul.f32 %v364, 1.442695
  %v366 = vpow.pop %v365
  %v367 = vadd.f32 %v366, 1.0
  %v368 = vrcp.pop %v367
  %v369 = vmul.f32 %v367, %v368
  %v370 = vsub.f32 1.0, %v369
  %v371 = vmul.f32 %v368, %v370
  %v372 = vadd.f32 %v368, %v371
  %vm373 = vweird.f32 %v367
  %vm374 = vweird.f32 %v368
  %vm375 = vmor %vm373, %vm374
  %v376 = vsel %vm375, %v368, %v372
  %v377 = vand.u32 2147483647, %v367
  %vm378 = vcmp.eq.f32.partialorder %v377, 8.507059e+37
  %v379 = vand.u32 %v367, 2147483648
  %v380 = vor.u32 1.1754944e-38, %v379
  %v381 = vsel %vm378, %v380, %v376
  %v382 = vmul.f32 1.0, %v381
  %v383 = vmul.f32 %v382, 2.0
  %v384 = vsub.f32 %v383, 1.0
  %v385 = vmul.f32 %v382, %v328
  %387 = vrot.lane.b32.xlu0 %v384, 32
  %v388 = vpop.permute.xlu0 %387
  %v390 = vmul.f32 %v382, %v388
  %392 = vrot.lane.b32.xlu0 %v390, 32
  %v393 = vpop.permute.xlu0 %392
  %v395 = vadd.f32 %v385, %v393
  %v396 = vtanh.pop %v395
  %398 = vrot.lane.b32.xlu0 %v396, 32
  %v399 = vpop.permute.xlu0 %398
  %v401 = vmul.f32 %v382, %v399
  %v402 = vmax.f32 %v401, 0.0
  %404 = vrot.lane.b32.xlu0 %v402, 32
  %v405 = vpop.permute.xlu0 %404
  %vm407 = vcmask 1048320
  %408 = vst.msk [vmem:[#allocation2] sm:$0xff] %vm407, %v405
  %410 = vrot.lane.b32.xlu0 %v401, 64
  %v411 = vpop.permute.xlu0 %410
  %v412 = vsel %vm127, %v411, 0
  %414 = vmatpush.msra.mxu0 0.0
  %415 = vmatpush.msra.mxu0 0.0
  %416 = vmatpush.msra.mxu0 0.0
  %417 = vmatpush.msra.mxu0 0.0
  %418 = vmatpush.msra.mxu0 0.0
  %419 = vmatpush.msra.mxu0 0.0
  %420 = vmatpush.msra.mxu0 0.0
  %421 = vmatpush.msra.mxu0 0.0
  %422 = vmatpush.msra.mxu0 0.0
  %423 = vmatpush.msra.mxu0 0.0
  %424 = vmatpush.msra.mxu0 0.0
  %425 = vmatpush.msra.mxu0 0.0
  %426 = vmatpush.msra.mxu0 %v124
  %427 = vmatpush.msra.mxu0 %v123
  %428 = vmatpush.msra.mxu0 %v122
  %429 = vmatpush.msra.mxu0 %v121
  %430 = vmatmul.f32.gmra.mxu0 %v412
  %v431 = vpop.f32.mrf.mxu0
  %v432 = vadd.f32 0.0, %v431
  %433 = vdwg.mxu0
  %v434 = vadd.f32 %v110, %v432
  %v435 = vxor.u32 %v434, 2147483648
  %v436 = vmul.f32 %v435, 1.442695
  %v437 = vpow.pop %v436
  %v438 = vadd.f32 %v437, 1.0
  %v439 = vrcp.pop %v438
  %v440 = vmul.f32 %v438, %v439
  %v441 = vsub.f32 1.0, %v440
  %v442 = vmul.f32 %v439, %v441
  %v443 = vadd.f32 %v439, %v442
  %vm444 = vweird.f32 %v438
  %vm445 = vweird.f32 %v439
  %vm446 = vmor %vm444, %vm445
  %v447 = vsel %vm446, %v439, %v443
  %v448 = vand.u32 2147483647, %v438
  %vm449 = vcmp.eq.f32.partialorder %v448, 8.507059e+37
  %v450 = vand.u32 %v438, 2147483648
  %v451 = vor.u32 1.1754944e-38, %v450
  %v452 = vsel %vm449, %v451, %v447
  %v453 = vmul.f32 1.0, %v452
  %v454 = vmul.f32 %v453, 2.0
  %v455 = vsub.f32 %v454, 1.0
  %v456 = vmul.f32 %v453, %v395
  %458 = vrot.lane.b32.xlu0 %v455, 32
  %v459 = vpop.permute.xlu0 %458
  %v461 = vmul.f32 %v453, %v459
  %463 = vrot.lane.b32.xlu0 %v461, 32
  %v464 = vpop.permute.xlu0 %463
  %v466 = vadd.f32 %v456, %v464
  %v467 = vtanh.pop %v466
  %469 = vrot.lane.b32.xlu0 %v467, 32
  %v470 = vpop.permute.xlu0 %469
  %v472 = vmul.f32 %v453, %v470
  %v473 = vmax.f32 %v472, 0.0
  %475 = vrot.lane.b32.xlu0 %v473, 64
  %v476 = vpop.permute.xlu0 %475
  %478 = vst.msk [vmem:[#allocation2 + $0x8] sm:$0xff] %vm127, %v476
  %480 = vrot.lane.b32.xlu0 %v472, 64
  %v481 = vpop.permute.xlu0 %480
  %v482 = vsel %vm127, %v481, 0
  %484 = vmatpush.msra.mxu0 0.0
  %485 = vmatpush.msra.mxu0 0.0
  %486 = vmatpush.msra.mxu0 0.0
  %487 = vmatpush.msra.mxu0 0.0
  %488 = vmatpush.msra.mxu0 0.0
  %489 = vmatpush.msra.mxu0 0.0
  %490 = vmatpush.msra.mxu0 0.0
  %491 = vmatpush.msra.mxu0 0.0
  %492 = vmatpush.msra.mxu0 0.0
  %493 = vmatpush.msra.mxu0 0.0
  %494 = vmatpush.msra.mxu0 0.0
  %495 = vmatpush.msra.mxu0 0.0
  %496 = vmatpush.msra.mxu0 %v124
  %497 = vmatpush.msra.mxu0 %v123
  %498 = vmatpush.msra.mxu0 %v122
  %499 = vmatpush.msra.mxu0 %v121
  %500 = vmatmul.f32.gmra.mxu0 %v482
  %v501 = vpop.f32.mrf.mxu0
  %v502 = vadd.f32 0.0, %v501
  %503 = vdwg.mxu0
  %v504 = vadd.f32 %v113, %v502
  %v505 = vxor.u32 %v504, 2147483648
  %v506 = vmul.f32 %v505, 1.442695
  %v507 = vpow.pop %v506
  %v508 = vadd.f32 %v507, 1.0
  %v509 = vrcp.pop %v508
  %v510 = vmul.f32 %v508, %v509
  %v511 = vsub.f32 1.0, %v510
  %v512 = vmul.f32 %v509, %v511
  %v513 = vadd.f32 %v509, %v512
  %vm514 = vweird.f32 %v508
  %vm515 = vweird.f32 %v509
  %vm516 = vmor %vm514, %vm515
  %v517 = vsel %vm516, %v509, %v513
  %v518 = vand.u32 2147483647, %v508
  %vm519 = vcmp.eq.f32.partialorder %v518, 8.507059e+37
  %v520 = vand.u32 %v508, 2147483648
  %v521 = vor.u32 1.1754944e-38, %v520
  %v522 = vsel %vm519, %v521, %v517
  %v523 = vmul.f32 1.0, %v522
  %v524 = vmul.f32 %v523, 2.0
  %v525 = vsub.f32 %v524, 1.0
  %v526 = vmul.f32 %v523, %v466
  %528 = vrot.lane.b32.xlu0 %v525, 32
  %v529 = vpop.permute.xlu0 %528
  %v531 = vmul.f32 %v523, %v529
  %533 = vrot.lane.b32.xlu0 %v531, 32
  %v534 = vpop.permute.xlu0 %533
  %v536 = vadd.f32 %v526, %v534
  %v537 = vtanh.pop %v536
  %539 = vrot.lane.b32.xlu0 %v537, 32
  %v540 = vpop.permute.xlu0 %539
  %v542 = vmul.f32 %v523, %v540
  %v543 = vmax.f32 %v542, 0.0
  %545 = vrot.lane.b32.xlu0 %v543, 96
  %v546 = vpop.permute.xlu0 %545
  %548 = vst.msk [vmem:[#allocation2 + $0x8] sm:$0xff] %vm269, %v546
  %550 = vrot.lane.b32.xlu0 %v542, 64
  %v551 = vpop.permute.xlu0 %550
  %v552 = vsel %vm127, %v551, 0
  %554 = vmatpush.msra.mxu0 0.0
  %555 = vmatpush.msra.mxu0 0.0
  %556 = vmatpush.msra.mxu0 0.0
  %557 = vmatpush.msra.mxu0 0.0
  %558 = vmatpush.msra.mxu0 0.0
  %559 = vmatpush.msra.mxu0 0.0
  %560 = vmatpush.msra.mxu0 0.0
  %561 = vmatpush.msra.mxu0 0.0
  %562 = vmatpush.msra.mxu0 0.0
  %563 = vmatpush.msra.mxu0 0.0
  %564 = vmatpush.msra.mxu0 0.0
  %565 = vmatpush.msra.mxu0 0.0
  %566 = vmatpush.msra.mxu0 %v124
  %567 = vmatpush.msra.mxu0 %v123
  %568 = vmatpush.msra.mxu0 %v122
  %569 = vmatpush.msra.mxu0 %v121
  %570 = vmatmul.f32.gmra.mxu0 %v552
  %v571 = vpop.f32.mrf.mxu0
  %v572 = vadd.f32 0.0, %v571
  %573 = vdwg.mxu0
  %v574 = vadd.f32 %v116, %v572
  %v575 = vxor.u32 %v574, 2147483648
  %v576 = vmul.f32 %v575, 1.442695
  %v577 = vpow.pop %v576
  %v578 = vadd.f32 %v577, 1.0
  %v579 = vrcp.pop %v578
  %v580 = vmul.f32 %v578, %v579
  %v581 = vsub.f32 1.0, %v580
  %v582 = vmul.f32 %v579, %v581
  %v583 = vadd.f32 %v579, %v582
  %vm584 = vweird.f32 %v578
  %vm585 = vweird.f32 %v579
  %vm586 = vmor %vm584, %vm585
  %v587 = vsel %vm586, %v579, %v583
  %v588 = vand.u32 2147483647, %v578
  %vm589 = vcmp.eq.f32.partialorder %v588, 8.507059e+37
  %v590 = vand.u32 %v578, 2147483648
  %v591 = vor.u32 1.1754944e-38, %v590
  %v592 = vsel %vm589, %v591, %v587
  %v593 = vmul.f32 1.0, %v592
  %v594 = vmul.f32 %v593, 2.0
  %v595 = vsub.f32 %v594, 1.0
  %v596 = vmul.f32 %v593, %v536
  %598 = vrot.lane.b32.xlu0 %v595, 32
  %v599 = vpop.permute.xlu0 %598
  %v601 = vmul.f32 %v593, %v599
  %603 = vrot.lane.b32.xlu0 %v601, 32
  %v604 = vpop.permute.xlu0 %603
  %v606 = vadd.f32 %v596, %v604
  %v607 = vtanh.pop %v606
  %609 = vrot.lane.b32.xlu0 %v607, 32
  %v610 = vpop.permute.xlu0 %609
  %v612 = vmul.f32 %v593, %v610
  %v613 = vmax.f32 %v612, 0.0
  %614 = vst.msk [vmem:[#allocation2 + $0x8] sm:$0xff] %vm336, %v613
  %616 = vrot.lane.b32.xlu0 %v612, 64
  %v617 = vpop.permute.xlu0 %616
  %v618 = vsel %vm127, %v617, 0
  %620 = vmatpush.msra.mxu0 0.0
  %621 = vmatpush.msra.mxu0 0.0
  %622 = vmatpush.msra.mxu0 0.0
  %623 = vmatpush.msra.mxu0 0.0
  %624 = vmatpush.msra.mxu0 0.0
  %625 = vmatpush.msra.mxu0 0.0
  %626 = vmatpush.msra.mxu0 0.0
  %627 = vmatpush.msra.mxu0 0.0
  %628 = vmatpush.msra.mxu0 0.0
  %629 = vmatpush.msra.mxu0 0.0
  %630 = vmatpush.msra.mxu0 0.0
  %631 = vmatpush.msra.mxu0 0.0
  %632 = vmatpush.msra.mxu0 %v124
  %633 = vmatpush.msra.mxu0 %v123
  %634 = vmatpush.msra.mxu0 %v122
  %635 = vmatpush.msra.mxu0 %v121
  %636 = vmatmul.f32.gmra.mxu0 %v618
  %v637 = vpop.f32.mrf.mxu0
  %v638 = vadd.f32 0.0, %v637
  %639 = vdwg.mxu0
  %v640 = vadd.f32 %v119, %v638
  %v641 = vxor.u32 %v640, 2147483648
  %v642 = vmul.f32 %v641, 1.442695
  %v643 = vpow.pop %v642
  %v644 = vadd.f32 %v643, 1.0
  %v645 = vrcp.pop %v644
  %v646 = vmul.f32 %v644, %v645
  %v647 = vsub.f32 1.0, %v646
  %v648 = vmul.f32 %v645, %v647
  %v649 = vadd.f32 %v645, %v648
  %vm650 = vweird.f32 %v644
  %vm651 = vweird.f32 %v645
  %vm652 = vmor %vm650, %vm651
  %v653 = vsel %vm652, %v645, %v649
  %v654 = vand.u32 2147483647, %v644
  %vm655 = vcmp.eq.f32.partialorder %v654, 8.507059e+37
  %v656 = vand.u32 %v644, 2147483648
  %v657 = vor.u32 1.1754944e-38, %v656
  %v658 = vsel %vm655, %v657, %v653
  %v659 = vmul.f32 1.0, %v658
  %v660 = vmul.f32 %v659, 2.0
  %v661 = vsub.f32 %v660, 1.0
  %v662 = vmul.f32 %v659, %v606
  %664 = vrot.lane.b32.xlu0 %v661, 32
  %v665 = vpop.permute.xlu0 %664
  %v667 = vmul.f32 %v659, %v665
  %669 = vrot.lane.b32.xlu0 %v667, 32
  %v670 = vpop.permute.xlu0 %669
  %v672 = vadd.f32 %v662, %v670
  %v673 = vtanh.pop %v672
  %675 = vrot.lane.b32.xlu0 %v673, 32
  %v676 = vpop.permute.xlu0 %675
  %v678 = vmul.f32 %v659, %v676
  %v679 = vmax.f32 %v678, 0.0
  %681 = vrot.lane.b32.xlu0 %v679, 32
  %v682 = vpop.permute.xlu0 %681
  %684 = vst.msk [vmem:[#allocation2 + $0x8] sm:$0xff] %vm407, %v682
  %v685 = vld [vmem:[#allocation2] sm:$0xff]
  %v686 = vld [vmem:[#allocation2 + $0x8] sm:$0xff]
  %v687 = vld [vmem:[%s6] sm:$0xff]
  %v688 = vld [vmem:[%s6 + $0x8] sm:$0xff]
  %v689 = vld [vmem:[%s6 + $0x10] sm:$0xff]
  %v690 = vld [vmem:[%s6 + $0x18] sm:$0xff]
  %v691 = vld [vmem:[%s6 + $0x20] sm:$0xff]
  %v692 = vld [vmem:[%s6 + $0x28] sm:$0xff]
  %v693 = vld [vmem:[%s6 + $0x30] sm:$0xff]
  %v694 = vld [vmem:[%s6 + $0x38] sm:$0xff]
  %v695 = vld [vmem:[%s6 + $0x40] sm:$0xff]
  %v696 = vld [vmem:[%s6 + $0x48] sm:$0xff]
  %v697 = vld [vmem:[%s6 + $0x50] sm:$0xff]
  %v698 = vld [vmem:[%s6 + $0x58] sm:$0xff]
  %v699 = vld [vmem:[%s6 + $0x60] sm:$0xff]
  %v700 = vld [vmem:[%s6 + $0x68] sm:$0xff]
  %v701 = vld [vmem:[%s6 + $0x70] sm:$0xff]
  %v702 = vld [vmem:[%s6 + $0x78] sm:$0xff]
  %v703 = vld [vmem:[%s6 + $0x80] sm:$0xff]
  %v704 = vld [vmem:[%s6 + $0x88] sm:$0xff]
  %v705 = vld [vmem:[%s6 + $0x90] sm:$0xff]
  %v706 = vld [vmem:[%s6 + $0x98] sm:$0xff]
  %v707 = vld [vmem:[%s6 + $0xa0] sm:$0xff]
  %v708 = vld [vmem:[%s6 + $0xa8] sm:$0xff]
  %v709 = vld [vmem:[%s6 + $0xb0] sm:$0xff]
  %v710 = vld [vmem:[%s6 + $0xb8] sm:$0xff]
  %v711 = vld [vmem:[%s6 + $0xc0] sm:$0xff]
  %v712 = vld [vmem:[%s6 + $0xc8] sm:$0xff]
  %v713 = vld [vmem:[%s6 + $0xd0] sm:$0xff]
  %v714 = vld [vmem:[%s6 + $0xd8] sm:$0xff]
  %v715 = vld [vmem:[%s6 + $0xe0] sm:$0xff]
  %v716 = vld [vmem:[%s6 + $0xe8] sm:$0xff]
  %v717 = vld [vmem:[%s6 + $0xf0] sm:$0xff]
  %v718 = vld [vmem:[%s6 + $0xf8] sm:$0xff]
  %v719 = vld [vmem:[%s7] sm:$0x1]
  %v721 = vperm.slane %v719, 0
  %723 = vmatpush.msra.mxu0 %v702
  %724 = vmatpush.msra.mxu0 %v701
  %725 = vmatpush.msra.mxu0 %v700
  %726 = vmatpush.msra.mxu0 %v699
  %727 = vmatpush.msra.mxu0 %v698
  %728 = vmatpush.msra.mxu0 %v697
  %729 = vmatpush.msra.mxu0 %v696
  %730 = vmatpush.msra.mxu0 %v695
  %731 = vmatpush.msra.mxu0 %v694
  %732 = vmatpush.msra.mxu0 %v693
  %733 = vmatpush.msra.mxu0 %v692
  %734 = vmatpush.msra.mxu0 %v691
  %735 = vmatpush.msra.mxu0 %v690
  %736 = vmatpush.msra.mxu0 %v689
  %737 = vmatpush.msra.mxu0 %v688
  %738 = vmatpush.msra.mxu0 %v687
  %739 = vmatmul.f32.gmra.mxu0 %v685
  %v740 = vpop.f32.mrf.mxu0
  %v741 = vadd.f32 %v721, %v740
  %742 = vdwg.mxu0
  %743 = vmatpush.msra.mxu0 %v718
  %744 = vmatpush.msra.mxu0 %v717
  %745 = vmatpush.msra.mxu0 %v716
  %746 = vmatpush.msra.mxu0 %v715
  %747 = vmatpush.msra.mxu0 %v714
  %748 = vmatpush.msra.mxu0 %v713
  %749 = vmatpush.msra.mxu0 %v712
  %750 = vmatpush.msra.mxu0 %v711
  %751 = vmatpush.msra.mxu0 %v710
  %752 = vmatpush.msra.mxu0 %v709
  %753 = vmatpush.msra.mxu0 %v708
  %754 = vmatpush.msra.mxu0 %v707
  %755 = vmatpush.msra.mxu0 %v706
  %756 = vmatpush.msra.mxu0 %v705
  %757 = vmatpush.msra.mxu0 %v704
  %758 = vmatpush.msra.mxu0 %v703
  %759 = vmatmul.f32.gmra.mxu0 %v686
  %v760 = vpop.f32.mrf.mxu0
  %v761 = vadd.f32 %v741, %v760
  %762 = vdwg.mxu0
  %v763 = vmax.f32 %v761, 0.0
  %v764 = vld [vmem:[%s8] sm:$0xff]
  %v765 = vld [vmem:[%s8 + $0x8] sm:$0xff]
  %v766 = vld [vmem:[%s8 + $0x10] sm:$0xff]
  %v767 = vld [vmem:[%s8 + $0x18] sm:$0xff]
  %v768 = vld [vmem:[%s9] sm:$0x1]
  %v770 = vperm.slane %v768, 0
  %v773 = vsel %vm127, %v763, 0
  %775 = vmatpush.msra.mxu0 0.0
  %776 = vmatpush.msra.mxu0 0.0
  %777 = vmatpush.msra.mxu0 0.0
  %778 = vmatpush.msra.mxu0 0.0
  %779 = vmatpush.msra.mxu0 0.0
  %780 = vmatpush.msra.mxu0 0.0
  %781 = vmatpush.msra.mxu0 0.0
  %782 = vmatpush.msra.mxu0 0.0
  %783 = vmatpush.msra.mxu0 0.0
  %784 = vmatpush.msra.mxu0 0.0
  %785 = vmatpush.msra.mxu0 0.0
  %786 = vmatpush.msra.mxu0 0.0
  %787 = vmatpush.msra.mxu0 %v767
  %788 = vmatpush.msra.mxu0 %v766
  %789 = vmatpush.msra.mxu0 %v765
  %790 = vmatpush.msra.mxu0 %v764
  %791 = vmatmul.f32.gmra.mxu0 %v773
  %v792 = vpop.f32.mrf.mxu0
  %v793 = vadd.f32 %v770, %v792
  %794 = vdwg.mxu0
  %v795 = vmax.f32 %v793, 0.0
  %v796 = vld [vmem:[%s10] sm:$0xff]
  %v797 = vld [vmem:[%s10 + $0x8] sm:$0xff]
  %v798 = vld [vmem:[%s11] sm:$0x1]
  %v800 = vperm.slane %v798, 0
  %v803 = vsel %vm55, %v795, 0
  %805 = vmatpush.msra.mxu0 0.0
  %806 = vmatpush.msra.mxu0 0.0
  %807 = vmatpush.msra.mxu0 0.0
  %808 = vmatpush.msra.mxu0 0.0
  %809 = vmatpush.msra.mxu0 0.0
  %810 = vmatpush.msra.mxu0 0.0
  %811 = vmatpush.msra.mxu0 0.0
  %812 = vmatpush.msra.mxu0 0.0
  %813 = vmatpush.msra.mxu0 0.0
  %814 = vmatpush.msra.mxu0 0.0
  %815 = vmatpush.msra.mxu0 0.0
  %816 = vmatpush.msra.mxu0 0.0
  %817 = vmatpush.msra.mxu0 0.0
  %818 = vmatpush.msra.mxu0 0.0
  %819 = vmatpush.msra.mxu0 %v797
  %820 = vmatpush.msra.mxu0 %v796
  %821 = vmatmul.f32.gmra.mxu0 %v803
  %v822 = vpop.f32.mrf.mxu0
  %v823 = vadd.f32 %v800, %v822
  %824 = vdwg.mxu0
  %vm825 = vcmask 31744
  %v826 = vsel %vm825, %v823, -inf
  %827 = vmax.xlane.f32.xlu0 %v826
  %v828 = vpop.xlane.xlu0 %827
  %v829 = vsub.f32 %v823, %v828
  %v830 = vmul.f32 %v829, 1.442695
  %v831 = vpow.pop %v830
  %v832 = vsel %vm825, %v831, 0.0
  %833 = vadd.xlane.f32.xlu0 %v832
  %v834 = vpop.xlane.xlu0 %833
  %v835 = vrcp.pop %v834
  %v836 = vmul.f32 %v834, %v835
  %v837 = vsub.f32 1.0, %v836
  %v838 = vmul.f32 %v835, %v837
  %v839 = vadd.f32 %v835, %v838
  %vm840 = vweird.f32 %v834
  %vm841 = vweird.f32 %v835
  %vm842 = vmor %vm840, %vm841
  %v843 = vsel %vm842, %v835, %v839
  %v844 = vand.u32 2147483647, %v834
  %vm845 = vcmp.eq.f32.partialorder %v844, 8.507059e+37
  %v846 = vand.u32 %v834, 2147483648
  %v847 = vor.u32 1.1754944e-38, %v846
  %v848 = vsel %vm845, %v847, %v843
  %v849 = vmul.f32 %v831, %v848
  %850 = vst.msk [vmem:[%s12] sm:$0xff] %vm825, %v849
  // Predicated region
  $region50: #{tpu_custom_call.1} parent=0 // pred_check
    _
  $region51: #{tpu_custom_call.1} parent=0 // pred_check_branch
    %852 = sbr.rel (0) target = $region53
  $region52: #{tpu_custom_call.1} parent=0 // pred_region
    _
  $region53: #{tpu_custom_call.1} parent=0 // pred_fallthru
    _
  // Predicated region
  $region54: #{tpu_custom_call.1} parent=0 // pred_check
    _
  $region55: #{tpu_custom_call.1} parent=0 // pred_check_branch
    %854 = sbr.rel (0) target = $region57
  $region56: #{tpu_custom_call.1} parent=0 // pred_region
    _
  $region57: #{tpu_custom_call.1} parent=0 // pred_fallthru
    _

</llo_original>
